<compile_context>
chip_gen: v5e
topology: v5e:2x2
jax: 0.10.0
libtpu: 0.0.40
codegen_flags: <defaults>
</compile_context>

<pallas_src>
import functools

import jax
import jax.numpy as jnp
from jax.experimental import pallas as pl
from jax.experimental.pallas import tpu as pltpu


_NUM_SPLITS = 2  # leading "parallel" grid axis; maps to the 2 TCs on v7x


def _adversary_loss_kernel(logits_ref, labels_ref, out_ref, acc_ref, *,
                           loss_type, margin, tm, w, blocks_per_split,
                           total_blocks, n_valid, needs_mask):
    c = pl.program_id(0)   # "parallel" split axis (a TensorCore on v7x)
    i = pl.program_id(1)   # "arbitrary" reduction axis within the split

    @pl.when(i == 0)
    def _init():
        acc_ref[...] = jnp.zeros_like(acc_ref)

    # Per-element cast to f32 inside the kernel (inputs arrive narrow).
    x = logits_ref[...].astype(jnp.float32)
    y = labels_ref[...].astype(jnp.float32)

    if loss_type == "ce_loss":
        # numerically-stable BCEWithLogits: max(x,0) - x*y + log(1+exp(-|x|))
        per = jnp.maximum(x, 0.0) - x * y + jnp.log1p(jnp.exp(-jnp.abs(x)))
    elif loss_type == "hinge_loss":
        # HingeEmbeddingLoss: x if y == 1 else max(0, margin - x)
        per = jnp.where(y == 1.0, x, jnp.maximum(0.0, margin - x))
    else:
        raise ValueError(f"unknown adversary_loss_type: {loss_type}")

    acc_rows = acc_ref.shape[0]

    def _accumulate(vals):
        # Fold the (tm, w) tile into the small resident accumulator with
        # VPU-only adds (leading-axis sum == elementwise vreg adds, no XLU).
        if tm == acc_rows:
            acc_ref[...] += vals
        else:
            acc_ref[...] += vals.reshape(tm // acc_rows, acc_rows, w).sum(axis=0)

    if needs_mask:
        blk = c * blocks_per_split + i
        # Only the very last row-block can contain zero-pad / partial-block
        # garbage; all earlier blocks accumulate unmasked.
        is_tail = blk == (total_blocks - 1)

        @pl.when(is_tail)
        def _masked():
            row = blk * tm + jax.lax.broadcasted_iota(jnp.int32, (tm, w), 0)
            col = jax.lax.broadcasted_iota(jnp.int32, (tm, w), 1)
            valid = row * w + col < n_valid
            _accumulate(jnp.where(valid, per, 0.0))

        @pl.when(jnp.logical_not(is_tail))
        def _unmasked():
            _accumulate(per)
    else:
        _accumulate(per)

    @pl.when(i == pl.num_programs(1) - 1)
    def _finish():
        # One small cross-lane/sublane reduce per core; broadcast the partial
        # sum into this core's lane-dense output block.  The tiny add across
        # cores happens in plain XLA in the wrapper.
        s = jnp.sum(acc_ref[...])
        out_ref[...] = jnp.full(out_ref.shape, s, dtype=jnp.float32)


def _choose_lane_width(n):
    """Largest 128-multiple dividing n (metadata-only reshape), else a padded
    default (pad is tiny for small n; rare for large n)."""
    for w in (1024, 512, 384, 256, 128):
        if n % w == 0:
            return w
    return 512 if n >= 4096 else 128


def _plan_tiling(r, w):
    """Return (tm, splits, blocks_per_split) for an (r, w) flat view."""
    if r <= 8:
        return r, 1, 1
    budget = 6 * 1024 * 1024                          # per-input f32 block ~6 MiB
    cap = max(8, (budget // (w * 4)) // 8 * 8)        # rows/block, multiple of 8
    tm = max(8, min(cap, (pl.cdiv(r, _NUM_SPLITS) // 8) * 8))
    g = pl.cdiv(r, tm)
    if g < _NUM_SPLITS:
        return tm, 1, g
    # Make the block count a multiple of the split count by shrinking the block
    # a little (keeps blocks large and every block index in bounds).
    t = tm
    while t - 8 >= max(8, tm // 2) and pl.cdiv(r, t) % _NUM_SPLITS != 0:
        t -= 8
    if pl.cdiv(r, t) % _NUM_SPLITS == 0:
        g = pl.cdiv(r, t)
        return t, _NUM_SPLITS, g // _NUM_SPLITS
    return tm, 1, g


def adversary_loss(class_labels, logits, example_weights, pos_weights,
                   adversary_loss_type):
    """JAX/Pallas equivalent of the PyTorch adversary_loss.forward."""
    del pos_weights  # see TODO(synk) at top of file
    B, C = logits.shape
    n = B * C

    # Narrow float labels to bf16 (0/1 and +-1 exact): halves label HBM bytes.
    labels = class_labels
    if jnp.issubdtype(labels.dtype, jnp.floating) and labels.dtype.itemsize >= 4:
        labels = labels.astype(jnp.bfloat16)

    # Lane-dense flat view: (B, C) -> (r, w) with w a multiple of 128.
    w = _choose_lane_width(n)
    r = pl.cdiv(n, w)
    flat_logits = logits.reshape(-1)
    flat_labels = labels.reshape(-1)
    if r * w != n:                       # rare: zero-pad the flat tail
        pad = r * w - n
        flat_logits = jnp.pad(flat_logits, (0, pad))
        flat_labels = jnp.pad(flat_labels, (0, pad))
    logits2d = flat_logits.reshape(r, w)
    labels2d = flat_labels.reshape(r, w)

    tm, splits, bps = _plan_tiling(r, w)
    g = splits * bps                      # total row-blocks
    needs_mask = (g * tm * w) != n        # pad and/or trailing partial block
    acc_rows = 8 if tm % 8 == 0 else tm

    kernel = functools.partial(
        _adversary_loss_kernel,
        loss_type=adversary_loss_type,
        margin=1.0,
        tm=tm, w=w,
        blocks_per_split=bps,
        total_blocks=g,
        n_valid=n,
        needs_mask=needs_mask,
    )

    if adversary_loss_type == "ce_loss":
        flops, transcendentals = 6 * n, 2 * n
    else:
        flops, transcendentals = 4 * n, 0
    cost = pl.CostEstimate(
        flops=flops,
        transcendentals=transcendentals,
        bytes_accessed=int(logits2d.size * logits2d.dtype.itemsize
                           + labels2d.size * labels2d.dtype.itemsize
                           + splits * 8 * 128 * 4),
    )

    partials = pl.pallas_call(
        kernel,
        out_shape=jax.ShapeDtypeStruct((splits, 8, 128), jnp.float32),
        grid_spec=pltpu.PrefetchScalarGridSpec(
            num_scalar_prefetch=0,
            grid=(splits, bps),
            in_specs=[
                pl.BlockSpec((tm, w), lambda c, i: (c * bps + i, 0)),
                pl.BlockSpec((tm, w), lambda c, i: (c * bps + i, 0)),
            ],
            out_specs=pl.BlockSpec((1, 8, 128), lambda c, i: (c, 0, 0)),
            scratch_shapes=[pltpu.VMEM((acc_rows, w), jnp.float32)],
        ),
        compiler_params=pltpu.CompilerParams(
            dimension_semantics=("parallel", "arbitrary"),
            vmem_limit_bytes=32 * 1024 * 1024,
        ),
        cost_estimate=cost,
    )(logits2d, labels2d)

    loss_mean = jnp.sum(partials[:, 0, 0]) / n
    # Tiny length-B mean: plain XLA fuses this for free; no kernel traffic.
    ew_mean = jnp.mean(example_weights.astype(jnp.float32))
    # mean(-1 * example_weights * loss_scalar) == -loss_scalar * mean(weights)
    return -loss_mean * ew_mean


def _reference(class_labels, logits, example_weights, loss_type):
    x = logits.astype(jnp.float32)
    y = class_labels.astype(jnp.float32)
    if loss_type == "ce_loss":
        per = jnp.maximum(x, 0.0) - x * y + jnp.log1p(jnp.exp(-jnp.abs(x)))
    else:
        per = jnp.where(y == 1.0, x, jnp.maximum(0.0, 1.0 - x))
    loss = jnp.mean(per)
    return jnp.mean(-1.0 * (example_weights.astype(jnp.float32) * loss))


if __name__ == "__main__":
    key = jax.random.PRNGKey(0)
    k1, k2, k3 = jax.random.split(key, 3)

    # B*C = 640 -> lane-dense W=128, metadata-only reshape, no masking.
    B, C = 20, 32
    logits = jax.random.normal(k1, (B, C), dtype=jnp.float32)
    labels01 = jax.random.bernoulli(k2, 0.5, (B, C)).astype(jnp.float32)
    labels_pm1 = 2.0 * labels01 - 1.0  # {-1, +1}
    example_weights = jax.random.uniform(k3, (B,), dtype=jnp.float32)
    pos_weights = jnp.ones((C,), dtype=jnp.float32)

    # ce_loss path
    out_ce = jax.block_until_ready(
        adversary_loss(labels01, logits, example_weights, pos_weights, "ce_loss"))
    ref_ce = _reference(labels01, logits, example_weights, "ce_loss")
    assert jnp.allclose(out_ce, ref_ce, rtol=1e-5, atol=1e-5), (out_ce, ref_ce)

    # hinge_loss path
    out_h = jax.block_until_ready(
        adversary_loss(labels_pm1, logits, example_weights, pos_weights, "hinge_loss"))
    ref_h = _reference(labels_pm1, logits, example_weights, "hinge_loss")
    assert jnp.allclose(out_h, ref_h, rtol=1e-5, atol=1e-5), (out_h, ref_h)

    # native bf16 logits: no wrapper up-cast, cast happens inside the kernel
    logits_bf16 = logits.astype(jnp.bfloat16)
    out_bf = jax.block_until_ready(
        adversary_loss(labels01, logits_bf16, example_weights, pos_weights, "ce_loss"))
    ref_bf = _reference(labels01, logits_bf16.astype(jnp.float32),
                        example_weights, "ce_loss")
    assert jnp.allclose(out_bf, ref_bf, rtol=1e-5, atol=1e-5), (out_bf, ref_bf)

    # tiny batch (B*C = 64 < 128): exercises the zero-pad + masked tail path
    Bs, Cs = 4, 16
    lg_s = jax.random.normal(k1, (Bs, Cs), dtype=jnp.float32)
    lb_s = jax.random.bernoulli(k2, 0.5, (Bs, Cs)).astype(jnp.float32)
    ew_s = jax.random.uniform(k3, (Bs,), dtype=jnp.float32)
    out_s = jax.block_until_ready(
        adversary_loss(lb_s, lg_s, ew_s, jnp.ones((Cs,), jnp.float32), "ce_loss"))
    ref_s = _reference(lb_s, lg_s, ew_s, "ce_loss")
    assert jnp.allclose(out_s, ref_s, rtol=1e-5, atol=1e-5), (out_s, ref_s)

    # B*C = 1320: exercises pad + 2-way split + partial trailing block + mask
    Bm, Cm = 33, 40
    lg_m = jax.random.normal(k1, (Bm, Cm), dtype=jnp.float32)
    lb_m = jax.random.bernoulli(k2, 0.5, (Bm, Cm)).astype(jnp.float32)
    ew_m = jax.random.uniform(k3, (Bm,), dtype=jnp.float32)
    out_m = jax.block_until_ready(
        adversary_loss(lb_m, lg_m, ew_m, jnp.ones((Cm,), jnp.float32), "ce_loss"))
    ref_m = _reference(lb_m, lg_m, ew_m, "ce_loss")
    assert jnp.allclose(out_m, ref_m, rtol=1e-5, atol=1e-5), (out_m, ref_m)
    out_mh = jax.block_until_ready(
        adversary_loss(2.0 * lb_m - 1.0, lg_m, ew_m, jnp.ones((Cm,), jnp.float32),
                       "hinge_loss"))
    ref_mh = _reference(2.0 * lb_m - 1.0, lg_m, ew_m, "hinge_loss")
    assert jnp.allclose(out_mh, ref_mh, rtol=1e-5, atol=1e-5), (out_mh, ref_mh)

    print("KERNEL_OK")
</pallas_src>

<mosaic_0001>
module attributes {stable_mosaic.version = 11 : i64} {
  func.func @_adversary_loss_kernel(%arg0: i32, %arg1: i32, %arg2: memref<5x128xf32, #tpu.memory_space<vmem>>, %arg3: memref<5x128xbf16, #tpu.memory_space<vmem>>, %arg4: memref<1x8x128xf32, #tpu.memory_space<vmem>>, %arg5: memref<5x128xf32, #tpu.memory_space<vmem>>) attributes {dimension_semantics = [#tpu.dimension_semantics<parallel>, #tpu.dimension_semantics<arbitrary>], iteration_bounds = array<i64: 1, 1>, scalar_prefetch = 0 : i64, scratch_operands = 1 : i64, tpu.core_type = #tpu.core_type<tc>, window_params = [{transform_indices = @transform_0, window_bounds = array<i64: 5, 128>}, {transform_indices = @transform_1, window_bounds = array<i64: 5, 128>}, {transform_indices = @transform_2, window_bounds = array<i64: 1, 8, 128>}]} {
    %c0_i32 = arith.constant 0 : i32
    %0 = arith.cmpi eq, %arg1, %c0_i32 : i32
    %1 = arith.extui %0 : i1 to i32
    %c0_i32_0 = arith.constant 0 : i32
    %2 = arith.cmpi ne, %1, %c0_i32_0 : i32
    scf.if %2 {
      %cst_11 = arith.constant 0.000000e+00 : f32
      %22 = vector.broadcast %cst_11 : f32 to vector<5x128xf32>
      %c0_12 = arith.constant 0 : index
      %c0_13 = arith.constant 0 : index
      %23 = vector.load %arg5[%c0_12, %c0_13] : memref<5x128xf32, #tpu.memory_space<vmem>>, vector<5x128xf32>
      tpu.vector_store %arg5[%c0_12, %c0_13], %22 {strides = array<i32>} : memref<5x128xf32, #tpu.memory_space<vmem>>, vector<5x128xf32>,
    } else {
    }
    %c0 = arith.constant 0 : index
    %c0_1 = arith.constant 0 : index
    %3 = vector.load %arg2[%c0, %c0_1] : memref<5x128xf32, #tpu.memory_space<vmem>>, vector<5x128xf32>
    %c0_2 = arith.constant 0 : index
    %c0_3 = arith.constant 0 : index
    %4 = vector.load %arg3[%c0_2, %c0_3] : memref<5x128xbf16, #tpu.memory_space<vmem>>, vector<5x128xbf16>
    %5 = arith.extf %4 : vector<5x128xbf16> to vector<5x128xf32>
    %cst = arith.constant 0.000000e+00 : f32
    %6 = vector.broadcast %cst : f32 to vector<5x128xf32>
    %7 = arith.maximumf %3, %6 : vector<5x128xf32>
    %8 = arith.mulf %3, %5 : vector<5x128xf32>
    %9 = arith.subf %7, %8 : vector<5x128xf32>
    %10 = math.absf %3 : vector<5x128xf32>
    %cst_4 = arith.constant 0.000000e+00 : f32
    %11 = vector.broadcast %cst_4 : f32 to vector<5x128xf32>
    %12 = arith.subf %11, %10 : vector<5x128xf32>
    %13 = math.exp %12 : vector<5x128xf32>
    %14 = math.log1p %13 : vector<5x128xf32>
    %15 = arith.addf %9, %14 : vector<5x128xf32>
    %c0_5 = arith.constant 0 : index
    %c0_6 = arith.constant 0 : index
    %16 = vector.load %arg5[%c0_5, %c0_6] : memref<5x128xf32, #tpu.memory_space<vmem>>, vector<5x128xf32>
    %17 = arith.addf %16, %15 : vector<5x128xf32>
    %c0_7 = arith.constant 0 : index
    %c0_8 = arith.constant 0 : index
    %18 = vector.load %arg5[%c0_7, %c0_8] : memref<5x128xf32, #tpu.memory_space<vmem>>, vector<5x128xf32>
    tpu.vector_store %arg5[%c0_7, %c0_8], %17 {strides = array<i32>} : memref<5x128xf32, #tpu.memory_space<vmem>>, vector<5x128xf32>,
    %c0_i32_9 = arith.constant 0 : i32
    %19 = arith.cmpi eq, %arg1, %c0_i32_9 : i32
    %20 = arith.extui %19 : i1 to i32
    %c0_i32_10 = arith.constant 0 : i32
    %21 = arith.cmpi ne, %20, %c0_i32_10 : i32
    scf.if %21 {
      %c0_11 = arith.constant 0 : index
      %c0_12 = arith.constant 0 : index
      %22 = vector.load %arg5[%c0_11, %c0_12] : memref<5x128xf32, #tpu.memory_space<vmem>>, vector<5x128xf32>
      %23 = vector.shape_cast %22 : vector<5x128xf32> to vector<1x5x128xf32>
      %cst_13 = arith.constant dense<0.000000e+00> : vector<1xf32>
      %24 = vector.multi_reduction <add>, %23, %cst_13 [1, 2] : vector<1x5x128xf32> to vector<1xf32>
      %25 = vector.shape_cast %24 : vector<1xf32> to vector<1x1x1xf32>
      %26 = vector.extract %25[0, 0, 0] : f32 from vector<1x1x1xf32>
      %27 = vector.broadcast %26 : f32 to vector<1x8x128xf32>
      %c0_14 = arith.constant 0 : index
      %c0_15 = arith.constant 0 : index
      %c0_16 = arith.constant 0 : index
      %28 = vector.load %arg4[%c0_14, %c0_15, %c0_16] : memref<1x8x128xf32, #tpu.memory_space<vmem>>, vector<1x8x128xf32>
      tpu.vector_store %arg4[%c0_14, %c0_15, %c0_16], %27 {strides = array<i32>} : memref<1x8x128xf32, #tpu.memory_space<vmem>>, vector<1x8x128xf32>,
    } else {
    }
    return
  }
  func.func @transform_0(%arg0: i32, %arg1: i32) -> (i32, i32) {
    %c1_i32 = arith.constant 1 : i32
    %0 = arith.muli %arg0, %c1_i32 : i32
    %1 = arith.addi %0, %arg1 : i32
    %c0_i32 = arith.constant 0 : i32
    %c0_i32_0 = arith.constant 0 : i32
    return %1, %c0_i32 : i32, i32
  }
  func.func @transform_1(%arg0: i32, %arg1: i32) -> (i32, i32) {
    %c1_i32 = arith.constant 1 : i32
    %0 = arith.muli %arg0, %c1_i32 : i32
    %1 = arith.addi %0, %arg1 : i32
    %c0_i32 = arith.constant 0 : i32
    %c0_i32_0 = arith.constant 0 : i32
    return %1, %c0_i32 : i32, i32
  }
  func.func @transform_2(%arg0: i32, %arg1: i32) -> (i32, i32, i32) {
    %c0_i32 = arith.constant 0 : i32
    %c0_i32_0 = arith.constant 0 : i32
    %c0_i32_1 = arith.constant 0 : i32
    return %arg0, %c0_i32, %c0_i32_0 : i32, i32, i32
  }
}

</mosaic_0001>

<llo_original>
// kernel: tpu_custom_call.1
$region0: #{tpu_custom_call.1}
  #allocation0 [shape = 'u32[]', space=smem, size = 0x4, offset = 0x4, fixed_abs, tag = 'smem constant byte address 0x4 - core index']
  #allocation1 [shape = 'u32[72,128]{1,0:T(1,128)}', space=vmem, size = 0x9000, scoped, tag = 'internal scratch']
  #allocation2 [shape = 'f32[5,128]{1,0:T(8,128)}', space=vmem, size = 0x1000, scoped, tag = 'scratch operand']
  %s0 = inlined_call_operand.hbm [shape: f32[5,128], index: 0, kind: input, shape index: {}]
  %s1 = inlined_call_operand.hbm [shape: bf16[5,128], index: 1, kind: input, shape index: {}]
  %s2 = inlined_call_operand.hbm [shape: f32[1,8,128], index: 2, kind: output, shape index: {}]
  %s3 = sld [smem:[#allocation0]]
  $region34: #{tpu_custom_call.1} parent=0
    _
  %s5 = ssub.s32 1, %s3
  %s6 = scalar_select 0, %s5, %s3
  $region1: #{tpu_custom_call.1} parent=0
    #allocation3 [shape = 'u8[4096]{0}', space=vmem, size = 0x1000, scoped, tag = 'input window, operand 0, single buffered']
    #allocation4 [shape = 's32[1]{0}', space=sflag, size = 0x4, scoped, tag = 'scoped memory for tpu_custom_call.1']
    #allocation5 [shape = 's32[1]{0}', space=sflag, size = 0x4, scoped, tag = 'scoped memory for tpu_custom_call.1']
    #allocation6 [shape = 'u8[2048]{0}', space=vmem, size = 0x800, scoped, tag = 'input window, operand 1, single buffered']
    #allocation7 [shape = 's32[1]{0}', space=sflag, size = 0x4, scoped, tag = 'scoped memory for tpu_custom_call.1']
    #allocation8 [shape = 'u8[4096]{0}', space=vmem, size = 0x1000, scoped, tag = 'output window, operand 0, single buffered']
    %7 = vsyncpa [#allocation4], 0
    %8 = vsyncpa [#allocation7], 0
    %9 = vsyncpa [#allocation5], 0
    // Predicated region
    $region2: #{tpu_custom_call.1} parent=1 // pred_check
      _
    $region3: #{tpu_custom_call.1} parent=1 // pred_check_branch
      %11 = sbr.rel (0) target = $region5
    $region4: #{tpu_custom_call.1} parent=1 // pred_region
      %s12 = sadd.s32 0, 0
      %14 = vsyncadd [#allocation4], 0
      %s15 = smul.addr %s12, 8
      %s16 = scalar_lea.hbm %s0, %s15
      %s18 = sshll.u32 %s16, 4
      %s19 = int_to_ptr.hbm [resolvable:$true] %s18
      %s20 = sshll.u32 [#allocation3], 4
      %s21 = int_to_ptr.vmem [resolvable:$true] %s20
      %23 = dma.hbm_to_vmem [thread:$0]  %s19, 128, %s21, [#allocation4]
    $region5: #{tpu_custom_call.1} parent=1 // pred_fallthru
      _
    // Predicated region
    $region6: #{tpu_custom_call.1} parent=1 // pred_check
      _
    $region7: #{tpu_custom_call.1} parent=1 // pred_check_branch
      %25 = sbr.rel (0) target = $region9
    $region8: #{tpu_custom_call.1} parent=1 // pred_region
      %s26 = sadd.s32 0, 0
      %28 = vsyncadd [#allocation7], 0
      %s29 = smul.addr %s26, 4
      %s30 = scalar_lea.hbm %s1, %s29
      %s32 = sshll.u32 %s30, 4
      %s33 = int_to_ptr.hbm [resolvable:$true] %s32
      %s34 = sshll.u32 [#allocation6], 4
      %s35 = int_to_ptr.vmem [resolvable:$true] %s34
      %37 = dma.hbm_to_vmem [thread:$0]  %s33, 64, %s35, [#allocation7]
    $region9: #{tpu_custom_call.1} parent=1 // pred_fallthru
      _
    // Predicated region
    $region10: #{tpu_custom_call.1} parent=1 // pred_check
      _
    $region11: #{tpu_custom_call.1} parent=1 // pred_check_branch
      %39 = sbr.rel (0) target = $region13
    $region12: #{tpu_custom_call.1} parent=1 // pred_region
      %41 = dma.done [#allocation4], 128
    $region13: #{tpu_custom_call.1} parent=1 // pred_fallthru
      _
    // Predicated region
    $region14: #{tpu_custom_call.1} parent=1 // pred_check
      _
    $region15: #{tpu_custom_call.1} parent=1 // pred_check_branch
      %43 = sbr.rel (0) target = $region17
    $region16: #{tpu_custom_call.1} parent=1 // pred_region
      %45 = dma.done [#allocation7], 64
    $region17: #{tpu_custom_call.1} parent=1 // pred_fallthru
      _
    %s46 = sadd.s32 0, 0
    %s47 = sadd.s32 0, 0
    %p48 = scmp.eq.s32.totalorder 0, 0
    // Predicated region
    $region18: #{tpu_custom_call.1} parent=1 // pred_check
      %p49 = pneg %p48
    $region19: #{tpu_custom_call.1} parent=1 // pred_check_branch
      %51 = sbr.rel (%p49) target = $region21
    $region20: #{tpu_custom_call.1} parent=1 // pred_region
      %52 = vst [vmem:[#allocation2] sm:$0x1f] 0.0
    $region21: #{tpu_custom_call.1} parent=1 // pred_fallthru
      _
    %v53 = vld [vmem:[#allocation3] sm:$0x1f]
    %v54 = vld [vmem:[#allocation6] sm:$0x7]
    %v55 = vunpack.c.l.bf16 %v54
    %v56 = vmax.f32 %v53, 0.0
    %v57 = vmul.f32 %v53, %v55
    %v58 = vsub.f32 %v56, %v57
    %v59 = vand.u32 2147483647, %v53
    %v60 = vsub.f32 0.0, %v59
    %v61 = vmul.f32 %v60, 1.442695
    %v62 = vpow.pop %v61
    %v63 = vadd.f32 %v62, 1.0
    %v64 = vlog2.pop %v63
    %v65 = vmul.f32 %v64, 0.6931472
    %v66 = vmul.f32 -0.5, %v62
    %v67 = vadd.f32 %v66, 1.0
    %v68 = vmul.f32 %v67, %v62
    %v69 = vand.u32 2147483647, %v62
    %vm70 = vcmp.lt.f32.partialorder %v69, 0.0004427343
    %v71 = vsel %vm70, %v68, %v65
    %v72 = vadd.f32 %v58, %v71
    %v73 = vld [vmem:[#allocation2] sm:$0x1f]
    %v74 = vadd.f32 %v73, %v72
    %75 = vst [vmem:[#allocation2] sm:$0x1f] %v74
    // Predicated region
    $region22: #{tpu_custom_call.1} parent=1 // pred_check
      %p76 = pneg %p48
    $region23: #{tpu_custom_call.1} parent=1 // pred_check_branch
      %78 = sbr.rel (%p76) target = $region25
    $region24: #{tpu_custom_call.1} parent=1 // pred_region
      %v79 = vld [vmem:[#allocation2] sm:$0x1f]
      %vm80 = vcmask 1044480
      %v81 = vsel %vm80, %v79, 0.0
      %82 = vadd.xlane.f32.xlu0 %v81
      %v83 = vpop.xlane.xlu0 %82
      %v84 = vrot.slane %v83, 4
      %v85 = vadd.f32 %v83, %v84
      %v86 = vrot.slane %v85, 2
      %v87 = vadd.f32 %v85, %v86
      %v88 = vrot.slane %v87, 1
      %v89 = vadd.f32 %v87, %v88
      %s90 = vtos %v89
      %v91 = vstv %s90
      %92 = vst [vmem:[#allocation8] sm:$0xff] %v91
    $region25: #{tpu_custom_call.1} parent=1 // pred_fallthru
      _
    // Predicated region
    $region26: #{tpu_custom_call.1} parent=1 // pred_check
      _
    $region27: #{tpu_custom_call.1} parent=1 // pred_check_branch
      %94 = sbr.rel (0) target = $region29
    $region28: #{tpu_custom_call.1} parent=1 // pred_region
      %96 = vsyncadd [#allocation5], 0
      %s98 = sshll.u32 [#allocation8], 4
      %s99 = int_to_ptr.vmem [resolvable:$true] %s98
      %s100 = sshll.u32 %s2, 4
      %s101 = int_to_ptr.hbm [resolvable:$true] %s100
      %103 = dma.vmem_to_hbm [thread:$0]  %s99, 128, %s101, [#allocation5]
    $region29: #{tpu_custom_call.1} parent=1 // pred_fallthru
      _
    // Predicated region
    $region30: #{tpu_custom_call.1} parent=1 // pred_check
      _
    $region31: #{tpu_custom_call.1} parent=1 // pred_check_branch
      %105 = sbr.rel (0) target = $region33
    $region32: #{tpu_custom_call.1} parent=1 // pred_region
      %107 = dma.done [#allocation5], 128
    $region33: #{tpu_custom_call.1} parent=1 // pred_fallthru
      _
    %108 = vsyncpa [#allocation4], 1
    %109 = vsyncpa [#allocation7], 1
    %110 = vsyncpa [#allocation5], 1

</llo_original>
